<compile_context>
chip_gen: v6e
topology: v6e:2x2x1
jax: 0.10.0
libtpu: 0.0.40
codegen_flags: <defaults>
</compile_context>

<pallas_src>
import jax
import jax.numpy as jnp
from jax.experimental import pallas as pl
from jax.experimental.pallas import tpu as pltpu


# ----------------------------------------------------------------------------- kernel

def hpnf_packed_kernel(a_ref, xw1_ref, p_ref, b1_ref, w2_ref, b2_ref, out_ref):
    """One grid step = Gb graphs packed block-diagonally.

    a_ref:   (1, Nb, Nb) bf16  block-diagonal packed normalized adjacency (Gb graphs)
    xw1_ref: (1, Nb, H)  bf16  packed X @ W1
    p_ref:   (1, Gb, Nb) f32   row g holds (pool_row_g @ A_g) in its own column block
    out_ref: (Gb, H)     f32   pooled GCN-layer-2 features, one row per graph
    """
    # GCN layer 1: relu(A @ (X W1) + b1).  bf16 MXU inputs, f32 accumulation, f32 epilogue.
    h1 = jnp.dot(a_ref[0], xw1_ref[0], preferred_element_type=jnp.float32) + b1_ref[...]
    h1 = jnp.maximum(h1, 0.0)                                             # (Nb, H) f32

    # Dropout: module evaluated in inference mode (training=False) -> identity.
    # TODO(synk): training-mode dropout would use pltpu.prng_seed / pltpu.prng_random_bits.

    # Collapsed GCN layer 2 + global_mean_pool:  pooled = (pool @ A) @ H1 @ W2 + b2.
    ph1 = jnp.dot(p_ref[0], h1, preferred_element_type=jnp.float32)       # (Gb, H)
    out_ref[...] = (jnp.dot(ph1, w2_ref[...], preferred_element_type=jnp.float32)
                    + b2_ref[...])


# ----------------------------------------------------------------------------- wrapper

def hpnf_forward(a_blocks, x_blocks, pool_rows, w1, b1, w2, b2, wc, bc):
    """a_blocks: (G, Np, Np) f32 per-graph normalized adjacency (Np padded to mult. of 16,
    zero rows/cols on padding); x_blocks: (G, Np, C) f32; pool_rows: (G, Np) f32 mean-pool
    weights (zero on padded nodes)."""
    G, Np, _ = a_blocks.shape
    H = w1.shape[-1]

    # Hoisted K=4 input projection (one batched matmul for the whole batch), shipped bf16.
    xw1 = jnp.einsum('gnc,ch->gnh', x_blocks, w1)                     # (G, Np, H) f32
    # Collapsed layer-2 propagation row: p_g @ A_g, computed in f32 (before the bf16 cast).
    pa = jnp.einsum('gj,gjk->gk', pool_rows, a_blocks)                # (G, Np) f32

    # Pack Gb graphs block-diagonally per grid step: Nb = Gb * Np ~ 128 fills the MXU M/K.
    Gb = max(1, 128 // Np)
    S = -(-G // Gb)                       # grid steps (demo keeps S >= 2 for v7x megacore)
    Nb = Gb * Np

    a_g = _pad_axis(a_blocks, 0, Gb).reshape(S, Gb, Np, Np)
    xw1_g = _pad_axis(xw1, 0, Gb).reshape(S, Gb, Np, H)
    pa_g = _pad_axis(pa, 0, Gb).reshape(S, Gb, Np)

    eye = jnp.eye(Gb, dtype=jnp.float32)
    a_packed = (jnp.einsum('sgij,gh->sgihj', a_g, eye)
                .reshape(S, Nb, Nb).astype(jnp.bfloat16))             # block-diagonal A tiles
    xw1_packed = xw1_g.reshape(S, Nb, H).astype(jnp.bfloat16)
    p_packed = jnp.einsum('sgj,gh->sghj', pa_g, eye).reshape(S, Gb, Nb)

    flops = S * (2 * Nb * Nb * H + 2 * Gb * Nb * H + 2 * Gb * H * H)
    bytes_accessed = (a_packed.size * 2 + xw1_packed.size * 2 + p_packed.size * 4
                      + (b1.size + w2.size + b2.size) * 4 + S * Gb * H * 4)

    pooled = pl.pallas_call(
        hpnf_packed_kernel,
        out_shape=jax.ShapeDtypeStruct((S * Gb, H), jnp.float32),
        grid_spec=pltpu.PrefetchScalarGridSpec(
            num_scalar_prefetch=0,
            grid=(S,),
            in_specs=[
                pl.BlockSpec((1, Nb, Nb), lambda s: (s, 0, 0)),   # packed A (bf16)
                pl.BlockSpec((1, Nb, H), lambda s: (s, 0, 0)),    # packed X @ W1 (bf16)
                pl.BlockSpec((1, Gb, Nb), lambda s: (s, 0, 0)),   # packed pool@A rows (f32)
                pl.BlockSpec((1, H), lambda s: (0, 0)),           # b1 (resident across grid)
                pl.BlockSpec((H, H), lambda s: (0, 0)),           # W2
                pl.BlockSpec((1, H), lambda s: (0, 0)),           # b2
            ],
            out_specs=pl.BlockSpec((Gb, H), lambda s: (s, 0)),
        ),
        compiler_params=pltpu.CompilerParams(
            dimension_semantics=("parallel",),    # packed steps are independent -> megacore
            vmem_limit_bytes=32 * 1024 * 1024,    # safe on all gens; tiny footprint at Nb=128
        ),
        cost_estimate=pl.CostEstimate(
            flops=flops, transcendentals=0, bytes_accessed=bytes_accessed),
    )(a_packed, xw1_packed, p_packed, b1, w2, b2)

    # Lane-narrow (2-wide) classifier stays in the XLA wrapper; dummy padded graphs dropped.
    return pooled[:G] @ wc + bc


# ----------------------------------------------------------------------- host-side glue

def build_normalized_adjacency(edge_index, num_nodes):
    """Dense GCN normalization: A_hat = D^-1/2 (A + I) D^-1/2, message flows src -> dst."""
    src, dst = edge_index[0], edge_index[1]
    a = jnp.zeros((num_nodes, num_nodes), jnp.float32).at[dst, src].add(1.0)
    a = a + jnp.eye(num_nodes, dtype=jnp.float32)
    deg = a.sum(axis=1)
    d_inv_sqrt = 1.0 / jnp.sqrt(jnp.maximum(deg, 1e-12))
    return d_inv_sqrt[:, None] * a * d_inv_sqrt[None, :]


def build_mean_pool_matrix(batch, num_graphs):
    """(G, N) matrix whose matmul with node features implements global_mean_pool."""
    one_hot = (batch[None, :] == jnp.arange(num_graphs)[:, None]).astype(jnp.float32)
    counts = one_hot.sum(axis=1, keepdims=True)
    return one_hot / jnp.maximum(counts, 1.0)


def _pad_axis(arr, axis, multiple):
    pad = (-arr.shape[axis]) % multiple
    if pad == 0:
        return arr
    widths = [(0, 0)] * arr.ndim
    widths[axis] = (0, pad)
    return jnp.pad(arr, widths)


def build_graph_blocks(a_hat, x, batch, num_graphs, nodes_per_graph):
    """Per-graph diagonal adjacency blocks, node features and mean-pool rows (16-padded)."""
    G, Np = num_graphs, nodes_per_graph
    gi = jnp.arange(G)
    a_blocks = a_hat.reshape(G, Np, G, Np)[gi, :, gi, :]                 # (G, Np, Np)
    x_blocks = x.reshape(G, Np, -1)                                      # (G, Np, C)
    pool = build_mean_pool_matrix(batch, G)                              # (G, N)
    pool_rows = pool.reshape(G, G, Np)[gi, gi, :]                        # (G, Np)

    # Pad node axis to a multiple of 16 (bf16 sublane packing).  Padded rows/cols of A and
    # padded pool weights are zero, so padding never leaks into the pooled result.
    a_blocks = _pad_axis(_pad_axis(a_blocks, 1, 16), 2, 16)
    x_blocks = _pad_axis(x_blocks, 1, 16)
    pool_rows = _pad_axis(pool_rows, 1, 16)
    return a_blocks, x_blocks, pool_rows


def reference_forward(a_hat, x, w1, b1, w2, b2, pool, wc, bc):
    h1 = jnp.maximum(a_hat @ (x @ w1) + b1, 0.0)
    h2 = a_hat @ (h1 @ w2) + b2
    return pool @ h2 @ wc + bc


# ------------------------------------------------------------------------------- demo

if __name__ == "__main__":
    # Small deterministic problem: 10 ring graphs x 8 nodes, in_channels=4, hidden=32.
    # (10 graphs -> padded to 16 -> 2 packed grid steps of 8 graphs each.)
    in_channels, hidden_channels, num_classes = 4, 32, 2
    nodes_per_graph, num_graphs = 8, 10
    N = nodes_per_graph * num_graphs

    key = jax.random.PRNGKey(0)
    kx, kw1, kb1, kw2, kb2, kwc, kbc = jax.random.split(key, 7)

    # Node features (data.x)
    x = jax.random.normal(kx, (N, in_channels), jnp.float32)

    # edge_index: an undirected ring within each graph (both directions listed).
    src_list, dst_list = [], []
    for g in range(num_graphs):
        base = g * nodes_per_graph
        for i in range(nodes_per_graph):
            u, v = base + i, base + (i + 1) % nodes_per_graph
            src_list += [u, v]
            dst_list += [v, u]
    edge_index = jnp.array([src_list, dst_list], dtype=jnp.int32)

    # data.batch: graph id per node.
    batch = jnp.repeat(jnp.arange(num_graphs, dtype=jnp.int32), nodes_per_graph)

    # Deterministic parameters (synthetic init, no checkpoint).
    w1 = jax.random.normal(kw1, (in_channels, hidden_channels), jnp.float32) * 0.1
    b1 = jax.random.normal(kb1, (1, hidden_channels), jnp.float32) * 0.1
    w2 = jax.random.normal(kw2, (hidden_channels, hidden_channels), jnp.float32) * 0.1
    b2 = jax.random.normal(kb2, (1, hidden_channels), jnp.float32) * 0.1
    wc = jax.random.normal(kwc, (hidden_channels, num_classes), jnp.float32) * 0.1  # weight.T
    bc = jax.random.normal(kbc, (1, num_classes), jnp.float32) * 0.1

    # Host-side graph densification, exploiting the block-diagonal batched structure.
    a_hat = build_normalized_adjacency(edge_index, N)
    a_blocks, x_blocks, pool_rows = build_graph_blocks(
        a_hat, x, batch, num_graphs, nodes_per_graph)

    logits = hpnf_forward(a_blocks, x_blocks, pool_rows, w1, b1, w2, b2, wc, bc)
    logits = jax.block_until_ready(logits)

    # f32 dense reference (tolerance covers the single bf16 A / bf16 XW1 matmul).
    pool_full = build_mean_pool_matrix(batch, num_graphs)
    ref = reference_forward(a_hat, x, w1, b1, w2, b2, pool_full, wc, bc)
    assert logits.shape == (num_graphs, num_classes)
    max_err = float(jnp.max(jnp.abs(logits - ref)))
    assert jnp.allclose(logits, ref, atol=1e-2, rtol=1e-2), max_err

    print("KERNEL_OK")
</pallas_src>

<mosaic_0001>
module attributes {stable_mosaic.version = 11 : i64} {
  func.func @hpnf_packed_kernel(%arg0: i32, %arg1: memref<1x128x128xbf16, #tpu.memory_space<vmem>>, %arg2: memref<1x128x32xbf16, #tpu.memory_space<vmem>>, %arg3: memref<1x8x128xf32, #tpu.memory_space<vmem>>, %arg4: memref<1x32xf32, #tpu.memory_space<vmem>>, %arg5: memref<32x32xf32, #tpu.memory_space<vmem>>, %arg6: memref<1x32xf32, #tpu.memory_space<vmem>>, %arg7: memref<8x32xf32, #tpu.memory_space<vmem>>) attributes {dimension_semantics = [#tpu.dimension_semantics<parallel>], iteration_bounds = array<i64: 2>, scalar_prefetch = 0 : i64, scratch_operands = 0 : i64, tpu.core_type = #tpu.core_type<tc>, window_params = [{transform_indices = @transform_0, window_bounds = array<i64: 1, 128, 128>}, {transform_indices = @transform_1, window_bounds = array<i64: 1, 128, 32>}, {transform_indices = @transform_2, window_bounds = array<i64: 1, 8, 128>}, {pipeline_mode = #tpu.pipeline_mode<synchronous>, transform_indices = @transform_3, window_bounds = array<i64: 1, 32>}, {pipeline_mode = #tpu.pipeline_mode<synchronous>, transform_indices = @transform_4, window_bounds = array<i64: 32, 32>}, {pipeline_mode = #tpu.pipeline_mode<synchronous>, transform_indices = @transform_5, window_bounds = array<i64: 1, 32>}, {transform_indices = @transform_6, window_bounds = array<i64: 8, 32>}]} {
    %c0 = arith.constant 0 : index
    %c0_0 = arith.constant 0 : index
    %c0_1 = arith.constant 0 : index
    %0 = vector.load %arg1[%c0, %c0_0, %c0_1] : memref<1x128x128xbf16, #tpu.memory_space<vmem>>, vector<1x128x128xbf16>
    %1 = vector.shape_cast %0 : vector<1x128x128xbf16> to vector<128x128xbf16>
    %c0_2 = arith.constant 0 : index
    %c0_3 = arith.constant 0 : index
    %c0_4 = arith.constant 0 : index
    %2 = vector.load %arg2[%c0_2, %c0_3, %c0_4] : memref<1x128x32xbf16, #tpu.memory_space<vmem>>, vector<1x128x32xbf16>
    %3 = vector.shape_cast %2 : vector<1x128x32xbf16> to vector<128x32xbf16>
    %cst = arith.constant dense<0.000000e+00> : vector<128x32xf32>
    %4 = tpu.matmul %1, %3, %cst {dimension_numbers = #tpu.dot_dimension_numbers<[1], [0], [0], [1], [0, 0, 1, 1], [], []>} : vector<128x128xbf16>, vector<128x32xbf16>, vector<128x32xf32> -> vector<128x32xf32>
    %c0_5 = arith.constant 0 : index
    %c0_6 = arith.constant 0 : index
    %5 = vector.load %arg4[%c0_5, %c0_6] : memref<1x32xf32, #tpu.memory_space<vmem>>, vector<1x32xf32>
    %6 = vector.broadcast %5 : vector<1x32xf32> to vector<128x32xf32>
    %7 = arith.addf %4, %6 : vector<128x32xf32>
    %cst_7 = arith.constant 0.000000e+00 : f32
    %8 = vector.broadcast %cst_7 : f32 to vector<128x32xf32>
    %9 = arith.maximumf %7, %8 : vector<128x32xf32>
    %c0_8 = arith.constant 0 : index
    %c0_9 = arith.constant 0 : index
    %c0_10 = arith.constant 0 : index
    %10 = vector.load %arg3[%c0_8, %c0_9, %c0_10] : memref<1x8x128xf32, #tpu.memory_space<vmem>>, vector<1x8x128xf32>
    %11 = vector.shape_cast %10 : vector<1x8x128xf32> to vector<8x128xf32>
    %cst_11 = arith.constant dense<0.000000e+00> : vector<8x32xf32>
    %12 = tpu.matmul %11, %9, %cst_11 {dimension_numbers = #tpu.dot_dimension_numbers<[1], [0], [0], [1], [0, 0, 1, 1], [], []>} : vector<8x128xf32>, vector<128x32xf32>, vector<8x32xf32> -> vector<8x32xf32>
    %c0_12 = arith.constant 0 : index
    %c0_13 = arith.constant 0 : index
    %13 = vector.load %arg5[%c0_12, %c0_13] : memref<32x32xf32, #tpu.memory_space<vmem>>, vector<32x32xf32>
    %cst_14 = arith.constant dense<0.000000e+00> : vector<8x32xf32>
    %14 = tpu.matmul %12, %13, %cst_14 {dimension_numbers = #tpu.dot_dimension_numbers<[1], [0], [0], [1], [0, 0, 1, 1], [], []>} : vector<8x32xf32>, vector<32x32xf32>, vector<8x32xf32> -> vector<8x32xf32>
    %c0_15 = arith.constant 0 : index
    %c0_16 = arith.constant 0 : index
    %15 = vector.load %arg6[%c0_15, %c0_16] : memref<1x32xf32, #tpu.memory_space<vmem>>, vector<1x32xf32>
    %16 = vector.broadcast %15 : vector<1x32xf32> to vector<8x32xf32>
    %17 = arith.addf %14, %16 : vector<8x32xf32>
    %c0_17 = arith.constant 0 : index
    %c0_18 = arith.constant 0 : index
    %18 = vector.load %arg7[%c0_17, %c0_18] : memref<8x32xf32, #tpu.memory_space<vmem>>, vector<8x32xf32>
    tpu.vector_store %arg7[%c0_17, %c0_18], %17 {strides = array<i32>} : memref<8x32xf32, #tpu.memory_space<vmem>>, vector<8x32xf32>,
    return
  }
  func.func @transform_0(%arg0: i32) -> (i32, i32, i32) {
    %c0_i32 = arith.constant 0 : i32
    %c0_i32_0 = arith.constant 0 : i32
    %c0_i32_1 = arith.constant 0 : i32
    return %arg0, %c0_i32, %c0_i32_0 : i32, i32, i32
  }
  func.func @transform_1(%arg0: i32) -> (i32, i32, i32) {
    %c0_i32 = arith.constant 0 : i32
    %c0_i32_0 = arith.constant 0 : i32
    %c0_i32_1 = arith.constant 0 : i32
    return %arg0, %c0_i32, %c0_i32_0 : i32, i32, i32
  }
  func.func @transform_2(%arg0: i32) -> (i32, i32, i32) {
    %c0_i32 = arith.constant 0 : i32
    %c0_i32_0 = arith.constant 0 : i32
    %c0_i32_1 = arith.constant 0 : i32
    return %arg0, %c0_i32, %c0_i32_0 : i32, i32, i32
  }
  func.func @transform_3(%arg0: i32) -> (i32, i32) {
    %c0_i32 = arith.constant 0 : i32
    %c0_i32_0 = arith.constant 0 : i32
    %c0_i32_1 = arith.constant 0 : i32
    return %c0_i32, %c0_i32_0 : i32, i32
  }
  func.func @transform_4(%arg0: i32) -> (i32, i32) {
    %c0_i32 = arith.constant 0 : i32
    %c0_i32_0 = arith.constant 0 : i32
    %c0_i32_1 = arith.constant 0 : i32
    return %c0_i32, %c0_i32_0 : i32, i32
  }
  func.func @transform_5(%arg0: i32) -> (i32, i32) {
    %c0_i32 = arith.constant 0 : i32
    %c0_i32_0 = arith.constant 0 : i32
    %c0_i32_1 = arith.constant 0 : i32
    return %c0_i32, %c0_i32_0 : i32, i32
  }
  func.func @transform_6(%arg0: i32) -> (i32, i32) {
    %c0_i32 = arith.constant 0 : i32
    %c0_i32_0 = arith.constant 0 : i32
    return %arg0, %c0_i32 : i32, i32
  }
}

</mosaic_0001>

<llo_original>
// kernel: tpu_custom_call.1
$region0: #{tpu_custom_call.1}
  #allocation0 [shape = 'u32[]', space=smem, size = 0x4, offset = 0x4, fixed_abs, tag = 'smem constant byte address 0x4 - core index']
  #allocation1 [shape = 'u32[144,128]{1,0:T(1,128)}', space=vmem, size = 0x12000, scoped, tag = 'internal scratch']
  %s0 = inlined_call_operand.vmem [shape: bf16[2,128,128], index: 0, kind: input, shape index: {}]
  %s1 = inlined_call_operand.vmem [shape: bf16[2,128,32], index: 1, kind: input, shape index: {}]
  %s2 = inlined_call_operand.hbm [shape: f32[2,8,128], index: 2, kind: input, shape index: {}]
  %s3 = inlined_call_operand.vmem [shape: f32[1,32], index: 3, kind: input, shape index: {}]
  %s4 = inlined_call_operand.vmem [shape: f32[32,32], index: 4, kind: input, shape index: {}]
  %s5 = inlined_call_operand.vmem [shape: f32[1,32], index: 5, kind: input, shape index: {}]
  %s6 = inlined_call_operand.hbm [shape: f32[16,32], index: 6, kind: output, shape index: {}]
  %s7 = sld [smem:[#allocation0]]
  $region61: #{tpu_custom_call.1} parent=0
    _
  %s9 = ssub.s32 1, %s7
  %s10 = scalar_select 0, %s9, %s7
  $region1: #{tpu_custom_call.1} parent=0
    #allocation2 [shape = 'u8[8192]{0}', space=vmem, size = 0x2000, scoped, tag = 'input window, operand 2']
    #allocation3 [shape = 's32[2]{0}', space=sflag, size = 0x8, scoped, tag = 'scoped memory for tpu_custom_call.1']
    #allocation4 [shape = 's32[2]{0}', space=sflag, size = 0x8, scoped, tag = 'scoped memory for tpu_custom_call.1']
    #allocation5 [shape = 'u8[8192]{0}', space=vmem, size = 0x2000, scoped, tag = 'output window, operand 0']
    %11 = vsyncpa [#allocation3], 0
    %s12 = scalar_lea.sflag [#allocation3], 1
    %13 = vsyncpa %s12, 0
    %14 = vsyncpa [#allocation4], 0
    %s15 = scalar_lea.sflag [#allocation4], 1
    %16 = vsyncpa %s15, 0
    loop: start=0, step=1, limit=4
    $region2: #{tpu_custom_call.1} parent=1 // loop_pre_header
      _
    $region3: #{tpu_custom_call.1} parent=1 // loop_header
      %s18 = sphi 0, %s22
      %p19 = scmp.ge.s32.totalorder %s18, 4
      %s28 = sphi 0, %s30
      %s31 = sphi 0, %s28
      %s32 = sphi 0, %s31
      %s48 = sphi 0, %s32
      %s54 = sphi 0, %s56
      %s57 = sphi 0, %s54
      %s58 = sphi 0, %s57
      %s74 = sphi 0, %s58
      %s80 = sphi 0, %s82
      %s83 = sphi 0, %s80
      %s84 = sphi 0, %s83
      %s100 = sphi 0, %s84
      %s104 = sphi 0, %s104
      %s106 = sphi 0, %s104
      %s107 = sphi 0, %s106
      %s121 = sphi 0, %s107
      %s125 = sphi 0, %s125
      %s127 = sphi 0, %s125
      %s128 = sphi 0, %s127
      %s142 = sphi 0, %s128
      %s146 = sphi 0, %s146
      %s148 = sphi 0, %s146
      %s149 = sphi 0, %s148
      %s163 = sphi 0, %s149
      %s169 = sphi 0, %s171
      %s172 = sphi 0, %s169
      %s173 = sphi 0, %s172
      %s189 = sphi 0, %s173
    $region4: #{tpu_custom_call.1} parent=1 // loop_header_branch
      %21 = sbr.rel (%p19) target = $region8
    $region5: #{tpu_custom_call.1} parent=1 // loop_body
      %s23 = ssub.s32 %s18, 1
      %s24 = ssub.s32 %s18, 2
      %s25 = sadd.s32 %s18, 1
      %s26 = ssub.s32 %s18, %s25
      %p27 = scmp.eq.s32.totalorder %s26, 0
      %s29 = sadd.s32 %s28, 1
      %s30 = scalar_select %p27, %s28, %s29
      %p33 = pneg %p27
      %p34 = scmp.eq.s32.totalorder %s18, 1
      %p35 = por %p33, %p34
      %p36 = scmp.ne.s32.totalorder %s28, %s31
      %p37 = scmp.eq.s32.totalorder %s18, 0
      %p38 = por %p36, %p37
      %p39 = scmp.ne.s32.totalorder %s28, %s31
      %p40 = scmp.eq.s32.totalorder %s23, 1
      %p41 = por %p39, %p40
      %p42 = scmp.ne.s32.totalorder %s31, %s32
      %p43 = scmp.eq.s32.totalorder %s23, 0
      %p44 = por %p42, %p43
      %p45 = scmp.ne.s32.totalorder %s31, %s32
      %p46 = scmp.eq.s32.totalorder %s24, 1
      %p47 = por %p45, %p46
      %p49 = scmp.ne.s32.totalorder %s32, %s48
      %p50 = scmp.eq.s32.totalorder %s24, 0
      %p51 = por %p49, %p50
      %s52 = ssub.s32 %s18, %s25
      %p53 = scmp.eq.s32.totalorder %s52, 0
      %s55 = sadd.s32 %s54, 1
      %s56 = scalar_select %p53, %s54, %s55
      %p59 = pneg %p53
      %p60 = scmp.eq.s32.totalorder %s18, 1
      %p61 = por %p59, %p60
      %p62 = scmp.ne.s32.totalorder %s54, %s57
      %p63 = scmp.eq.s32.totalorder %s18, 0
      %p64 = por %p62, %p63
      %p65 = scmp.ne.s32.totalorder %s54, %s57
      %p66 = scmp.eq.s32.totalorder %s23, 1
      %p67 = por %p65, %p66
      %p68 = scmp.ne.s32.totalorder %s57, %s58
      %p69 = scmp.eq.s32.totalorder %s23, 0
      %p70 = por %p68, %p69
      %p71 = scmp.ne.s32.totalorder %s57, %s58
      %p72 = scmp.eq.s32.totalorder %s24, 1
      %p73 = por %p71, %p72
      %p75 = scmp.ne.s32.totalorder %s58, %s74
      %p76 = scmp.eq.s32.totalorder %s24, 0
      %p77 = por %p75, %p76
      %s78 = ssub.s32 %s18, %s25
      %p79 = scmp.eq.s32.totalorder %s78, 0
      %s81 = sadd.s32 %s80, 1
      %s82 = scalar_select %p79, %s80, %s81
      %p85 = pneg %p79
      %p86 = scmp.eq.s32.totalorder %s18, 1
      %p87 = por %p85, %p86
      %p88 = scmp.ne.s32.totalorder %s80, %s83
      %p89 = scmp.eq.s32.totalorder %s18, 0
      %p90 = por %p88, %p89
      %p91 = scmp.ne.s32.totalorder %s80, %s83
      %p92 = scmp.eq.s32.totalorder %s23, 1
      %p93 = por %p91, %p92
      %p94 = scmp.ne.s32.totalorder %s83, %s84
      %p95 = scmp.eq.s32.totalorder %s23, 0
      %p96 = por %p94, %p95
      %p97 = scmp.ne.s32.totalorder %s83, %s84
      %p98 = scmp.eq.s32.totalorder %s24, 1
      %p99 = por %p97, %p98
      %p101 = scmp.ne.s32.totalorder %s84, %s100
      %p102 = scmp.eq.s32.totalorder %s24, 0
      %p103 = por %p101, %p102
      %s105 = sadd.s32 %s104, 1
      %p108 = scmp.eq.s32.totalorder %s18, 1
      %p109 = scmp.ne.s32.totalorder %s104, %s106
      %p110 = scmp.eq.s32.totalorder %s18, 0
      %p111 = por %p109, %p110
      %p112 = scmp.ne.s32.totalorder %s104, %s106
      %p113 = scmp.eq.s32.totalorder %s23, 1
      %p114 = por %p112, %p113
      %p115 = scmp.ne.s32.totalorder %s106, %s107
      %p116 = scmp.eq.s32.totalorder %s23, 0
      %p117 = por %p115, %p116
      %p118 = scmp.ne.s32.totalorder %s106, %s107
      %p119 = scmp.eq.s32.totalorder %s24, 1
      %p120 = por %p118, %p119
      %p122 = scmp.ne.s32.totalorder %s107, %s121
      %p123 = scmp.eq.s32.totalorder %s24, 0
      %p124 = por %p122, %p123
      %s126 = sadd.s32 %s125, 1
      %p129 = scmp.eq.s32.totalorder %s18, 1
      %p130 = scmp.ne.s32.totalorder %s125, %s127
      %p131 = scmp.eq.s32.totalorder %s18, 0
      %p132 = por %p130, %p131
      %p133 = scmp.ne.s32.totalorder %s125, %s127
      %p134 = scmp.eq.s32.totalorder %s23, 1
      %p135 = por %p133, %p134
      %p136 = scmp.ne.s32.totalorder %s127, %s128
      %p137 = scmp.eq.s32.totalorder %s23, 0
      %p138 = por %p136, %p137
      %p139 = scmp.ne.s32.totalorder %s127, %s128
      %p140 = scmp.eq.s32.totalorder %s24, 1
      %p141 = por %p139, %p140
      %p143 = scmp.ne.s32.totalorder %s128, %s142
      %p144 = scmp.eq.s32.totalorder %s24, 0
      %p145 = por %p143, %p144
      %s147 = sadd.s32 %s146, 1
      %p150 = scmp.eq.s32.totalorder %s18, 1
      %p151 = scmp.ne.s32.totalorder %s146, %s148
      %p152 = scmp.eq.s32.totalorder %s18, 0
      %p153 = por %p151, %p152
      %p154 = scmp.ne.s32.totalorder %s146, %s148
      %p155 = scmp.eq.s32.totalorder %s23, 1
      %p156 = por %p154, %p155
      %p157 = scmp.ne.s32.totalorder %s148, %s149
      %p158 = scmp.eq.s32.totalorder %s23, 0
      %p159 = por %p157, %p158
      %p160 = scmp.ne.s32.totalorder %s148, %s149
      %p161 = scmp.eq.s32.totalorder %s24, 1
      %p162 = por %p160, %p161
      %p164 = scmp.ne.s32.totalorder %s149, %s163
      %p165 = scmp.eq.s32.totalorder %s24, 0
      %p166 = por %p164, %p165
      %s167 = ssub.s32 %s18, %s25
      %p168 = scmp.eq.s32.totalorder %s167, 0
      %s170 = sadd.s32 %s169, 1
      %s171 = scalar_select %p168, %s169, %s170
      %p174 = pneg %p168
      %p175 = scmp.eq.s32.totalorder %s18, 1
      %p176 = por %p174, %p175
      %p177 = scmp.ne.s32.totalorder %s169, %s172
      %p178 = scmp.eq.s32.totalorder %s18, 0
      %p179 = por %p177, %p178
      %p180 = scmp.ne.s32.totalorder %s169, %s172
      %p181 = scmp.eq.s32.totalorder %s23, 1
      %p182 = por %p180, %p181
      %p183 = scmp.ne.s32.totalorder %s172, %s173
      %p184 = scmp.eq.s32.totalorder %s23, 0
      %p185 = por %p183, %p184
      %p186 = scmp.ne.s32.totalorder %s172, %s173
      %p187 = scmp.eq.s32.totalorder %s24, 1
      %p188 = por %p186, %p187
      %p190 = scmp.ne.s32.totalorder %s173, %s189
      %p191 = scmp.eq.s32.totalorder %s24, 0
      %p192 = por %p190, %p191
      %p193 = scmp.le.s32.totalorder 1, %s18
      %p194 = scmp.lt.s32.totalorder %s18, 3
      %p195 = pnand %p193, %p194
      %p196 = pneg %p195
      // Predicated region
      $region9: #{tpu_custom_call.1} parent=5 // pred_check
        _
      $region10: #{tpu_custom_call.1} parent=5 // pred_check_branch
        %198 = sbr.rel (%p195) target = $region12
      $region11: #{tpu_custom_call.1} parent=5 // pred_region
        %s199 = ssub.s32 %s18, 1
        // Predicated region
        $region13: #{tpu_custom_call.1} parent=11 // pred_check
          %p200 = pneg %p117
        $region14: #{tpu_custom_call.1} parent=11 // pred_check_branch
          %202 = sbr.rel (%p200) target = $region16
        $region15: #{tpu_custom_call.1} parent=11 // pred_region
          _
        $region16: #{tpu_custom_call.1} parent=11 // pred_fallthru
          _
        // Predicated region
        $region17: #{tpu_custom_call.1} parent=11 // pred_check
          %p203 = pneg %p138
        $region18: #{tpu_custom_call.1} parent=11 // pred_check_branch
          %205 = sbr.rel (%p203) target = $region20
        $region19: #{tpu_custom_call.1} parent=11 // pred_region
          _
        $region20: #{tpu_custom_call.1} parent=11 // pred_fallthru
          _
        // Predicated region
        $region21: #{tpu_custom_call.1} parent=11 // pred_check
          %p206 = pneg %p159
        $region22: #{tpu_custom_call.1} parent=11 // pred_check_branch
          %208 = sbr.rel (%p206) target = $region24
        $region23: #{tpu_custom_call.1} parent=11 // pred_region
          _
        $region24: #{tpu_custom_call.1} parent=11 // pred_fallthru
          _
      $region12: #{tpu_custom_call.1} parent=5 // pred_fallthru
        _
      %p209 = scmp.lt.s32.totalorder %s18, 2
      // Predicated region
      $region25: #{tpu_custom_call.1} parent=5 // pred_check
        %p210 = pneg %p209
      $region26: #{tpu_custom_call.1} parent=5 // pred_check_branch
        %212 = sbr.rel (%p210) target = $region28
      $region27: #{tpu_custom_call.1} parent=5 // pred_region
        // Predicated region
        $region29: #{tpu_custom_call.1} parent=27 // pred_check
          %p213 = pneg %p38
        $region30: #{tpu_custom_call.1} parent=27 // pred_check_branch
          %215 = sbr.rel (%p213) target = $region32
        $region31: #{tpu_custom_call.1} parent=27 // pred_region
          %p216 = scmp.lt.s32.totalorder %s18, 1
          %s217 = scalar_select %p216, %s18, 1
          %s218 = smul.addr %s217, 16
          %s219 = smul.addr %s218, 4
          %s220 = scalar_lea.vmem %s0, %s219
        $region32: #{tpu_custom_call.1} parent=27 // pred_fallthru
          _
        // Predicated region
        $region33: #{tpu_custom_call.1} parent=27 // pred_check
          %p221 = pneg %p64
        $region34: #{tpu_custom_call.1} parent=27 // pred_check_branch
          %223 = sbr.rel (%p221) target = $region36
        $region35: #{tpu_custom_call.1} parent=27 // pred_region
          %p224 = scmp.lt.s32.totalorder %s18, 1
          %s225 = scalar_select %p224, %s18, 1
          %s226 = smul.addr %s225, 16
          %s227 = smul.addr %s226, 4
          %s228 = scalar_lea.vmem %s1, %s227
        $region36: #{tpu_custom_call.1} parent=27 // pred_fallthru
          _
        // Predicated region
        $region37: #{tpu_custom_call.1} parent=27 // pred_check
          %p229 = pneg %p90
        $region38: #{tpu_custom_call.1} parent=27 // pred_check_branch
          %231 = sbr.rel (%p229) target = $region40
        $region39: #{tpu_custom_call.1} parent=27 // pred_region
          %s232 = sand.u32 %s80, 1
          %s233 = scalar_lea.sflag [#allocation3], %s232
          %s234 = sand.u32 %s80, 1
          %s235 = smul.addr %s234, 8
          %s236 = scalar_lea.vmem [#allocation2], %s235
          %s238 = ssub.s32 128, 128
          %239 = vsyncadd %s233, %s238
          %s240 = smul.addr %s18, 128
          %s241 = scalar_lea.hbm %s2, %s240
          %s243 = sshll.u32 %s236, 4
          %s244 = int_to_ptr.vmem [resolvable:$true] %s243
          %246 = dma.hbm_to_vmem [thread:$0]  %s241, 128, %s244, %s233
        $region40: #{tpu_custom_call.1} parent=27 // pred_fallthru
          _
      $region28: #{tpu_custom_call.1} parent=5 // pred_fallthru
        _
      %p247 = scmp.le.s32.totalorder 1, %s18
      %p248 = scmp.lt.s32.totalorder %s18, 3
      %p249 = pnand %p247, %p248
      %p250 = pneg %p249
      // Predicated region
      $region41: #{tpu_custom_call.1} parent=5 // pred_check
        _
      $region42: #{tpu_custom_call.1} parent=5 // pred_check_branch
        %252 = sbr.rel (%p249) target = $region44
      $region43: #{tpu_custom_call.1} parent=5 // pred_region
        %s253 = ssub.s32 %s18, 1
        %s254 = sand.u32 %s83, 1
        %s255 = scalar_lea.sflag [#allocation3], %s254
        %s256 = sand.u32 %s83, 1
        %s257 = smul.addr %s256, 8
        %s258 = scalar_lea.vmem [#allocation2], %s257
        // Predicated region
        $region45: #{tpu_custom_call.1} parent=43 // pred_check
          %p259 = pneg %p96
        $region46: #{tpu_custom_call.1} parent=43 // pred_check_branch
          %261 = sbr.rel (%p259) target = $region48
        $region47: #{tpu_custom_call.1} parent=43 // pred_region
          %262 = dma.done %s255, 128
        $region48: #{tpu_custom_call.1} parent=43 // pred_fallthru
          _
        %p263 = scmp.lt.s32.totalorder %s23, 1
        %s264 = scalar_select %p263, %s23, 1
        %s265 = smul.addr %s264, 16
        %s266 = smul.addr %s265, 4
        %s267 = scalar_lea.vmem %s0, %s266
        %p268 = pneg %p44
        %p269 = pneg %p41
        %p270 = scmp.lt.s32.totalorder %s23, 1
        %s271 = scalar_select %p270, %s23, 1
        %s272 = smul.addr %s271, 16
        %s273 = smul.addr %s272, 4
        %s274 = scalar_lea.vmem %s1, %s273
        %p275 = pneg %p70
        %p276 = pneg %p67
        %s277 = sand.u32 %s83, 1
        %s278 = scalar_lea.sflag [#allocation3], %s277
        %s279 = sand.u32 %s83, 1
        %s280 = smul.addr %s279, 8
        %s281 = scalar_lea.vmem [#allocation2], %s280
        %p282 = pneg %p96
        %p283 = pneg %p93
        %p284 = pneg %p117
        %p285 = pneg %p114
        %p286 = pneg %p138
        %p287 = pneg %p135
        %p288 = pneg %p159
        %p289 = pneg %p156
        %p290 = pneg %p185
        %p291 = pneg %p182
        %s292 = sand.u32 %s172, 1
        %s293 = scalar_lea.sflag [#allocation4], %s292
        %s294 = sand.u32 %s172, 1
        %s295 = smul.addr %s294, 8
        %s296 = scalar_lea.vmem [#allocation5], %s295
        %p297 = scmp.lt.s32.totalorder %s23, 1
        %s298 = scalar_select %p297, %s23, 1
        %s299 = smul.addr %s298, 16
        %s300 = smul.addr %s299, 4
        %s301 = scalar_lea.vmem %s0, %s300
        %p302 = scmp.lt.s32.totalorder %s23, 1
        %s303 = scalar_select %p302, %s23, 1
        %s304 = smul.addr %s303, 16
        %s305 = smul.addr %s304, 4
        %s306 = scalar_lea.vmem %s1, %s305
        %v308 = vld [vmem:[%s301] sm:$0xf]
        %v309 = vld [vmem:[%s301 + $0x4] sm:$0xf]
        %v310 = vld [vmem:[%s301 + $0x8] sm:$0xf]
        %v311 = vld [vmem:[%s301 + $0xc] sm:$0xf]
        %v312 = vld [vmem:[%s301 + $0x10] sm:$0xf]
        %v313 = vld [vmem:[%s301 + $0x14] sm:$0xf]
        %v314 = vld [vmem:[%s301 + $0x18] sm:$0xf]
        %v315 = vld [vmem:[%s301 + $0x1c] sm:$0xf]
        %v316 = vld [vmem:[%s301 + $0x20] sm:$0xf]
        %v317 = vld [vmem:[%s301 + $0x24] sm:$0xf]
        %v318 = vld [vmem:[%s301 + $0x28] sm:$0xf]
        %v319 = vld [vmem:[%s301 + $0x2c] sm:$0xf]
        %v320 = vld [vmem:[%s301 + $0x30] sm:$0xf]
        %v321 = vld [vmem:[%s301 + $0x34] sm:$0xf]
        %v322 = vld [vmem:[%s301 + $0x38] sm:$0xf]
        %v323 = vld [vmem:[%s301 + $0x3c] sm:$0xf]
        %v324 = vld [vmem:[%s306] sm:$0xf]
        %v325 = vld [vmem:[%s306 + $0x4] sm:$0xf]
        %v326 = vld [vmem:[%s306 + $0x8] sm:$0xf]
        %v327 = vld [vmem:[%s306 + $0xc] sm:$0xf]
        %v328 = vld [vmem:[%s306 + $0x10] sm:$0xf]
        %v329 = vld [vmem:[%s306 + $0x14] sm:$0xf]
        %v330 = vld [vmem:[%s306 + $0x18] sm:$0xf]
        %v331 = vld [vmem:[%s306 + $0x1c] sm:$0xf]
        %v332 = vld [vmem:[%s306 + $0x20] sm:$0xf]
        %v333 = vld [vmem:[%s306 + $0x24] sm:$0xf]
        %v334 = vld [vmem:[%s306 + $0x28] sm:$0xf]
        %v335 = vld [vmem:[%s306 + $0x2c] sm:$0xf]
        %v336 = vld [vmem:[%s306 + $0x30] sm:$0xf]
        %v337 = vld [vmem:[%s306 + $0x34] sm:$0xf]
        %v338 = vld [vmem:[%s306 + $0x38] sm:$0xf]
        %v339 = vld [vmem:[%s306 + $0x3c] sm:$0xf]
        %v340 = vld [vmem:[%s3] sm:$0x1]
        %v342 = vlaneseq
        %v343 = vshrl.u32 %v342, 7
        %v344 = vsub.s32 0, %v343
        %v345 = vrot.slane %v340, %v344
        %v363 = vunpack.c.l.b16 %v308
        %v364 = vunpack.c.l.b16 %v309
        %v365 = vunpack.c.l.b16 %v310
        %v366 = vunpack.c.l.b16 %v311
        %v367 = vunpack.c.l.b16 %v312
        %v368 = vunpack.c.l.b16 %v313
        %v369 = vunpack.c.l.b16 %v314
        %v370 = vunpack.c.l.b16 %v315
        %v371 = vunpack.c.l.b16 %v316
        %v372 = vunpack.c.l.b16 %v317
        %v373 = vunpack.c.l.b16 %v318
        %v374 = vunpack.c.l.b16 %v319
        %v375 = vunpack.c.l.b16 %v320
        %v376 = vunpack.c.l.b16 %v321
        %v377 = vunpack.c.l.b16 %v322
        %v378 = vunpack.c.l.b16 %v323
        %v379 = vpack.c.b16 %v364, %v363
        %v380 = vpack.c.b16 %v366, %v365
        %v381 = vpack.c.b16 %v368, %v367
        %v382 = vpack.c.b16 %v370, %v369
        %v383 = vpack.c.b16 %v372, %v371
        %v384 = vpack.c.b16 %v374, %v373
        %v385 = vpack.c.b16 %v376, %v375
        %v386 = vpack.c.b16 %v378, %v377
        %v411 = vunpack.c.l.b16 %v324
        %v412 = vunpack.c.l.b16 %v325
        %v413 = vunpack.c.l.b16 %v326
        %v414 = vunpack.c.l.b16 %v327
        %v415 = vunpack.c.l.b16 %v328
        %v416 = vunpack.c.l.b16 %v329
        %v417 = vunpack.c.l.b16 %v330
        %v418 = vunpack.c.l.b16 %v331
        %v419 = vunpack.c.l.b16 %v332
        %v420 = vunpack.c.l.b16 %v333
        %v421 = vunpack.c.l.b16 %v334
        %v422 = vunpack.c.l.b16 %v335
        %v423 = vunpack.c.l.b16 %v336
        %v424 = vunpack.c.l.b16 %v337
        %v425 = vunpack.c.l.b16 %v338
        %v426 = vunpack.c.l.b16 %v339
        %v427 = vpack.c.b16 %v412, %v411
        %v428 = vpack.c.b16 %v414, %v413
        %v429 = vpack.c.b16 %v416, %v415
        %v430 = vpack.c.b16 %v418, %v417
        %v431 = vpack.c.b16 %v420, %v419
        %v432 = vpack.c.b16 %v422, %v421
        %v433 = vpack.c.b16 %v424, %v423
        %v434 = vpack.c.b16 %v426, %v425
        %443 = vmatprep.subr.bf16.mxu0 0
        %444 = vmatpush1.bf16.msra.mxu0 %v434
        %445 = vmatprep.subr.bf16.mxu0 0
        %446 = vmatpush1.bf16.msra.mxu0 %v433
        %447 = vmatprep.subr.bf16.mxu0 0
        %448 = vmatpush1.bf16.msra.mxu0 %v432
        %449 = vmatprep.subr.bf16.mxu0 0
        %450 = vmatpush1.bf16.msra.mxu0 %v431
        %451 = vmatprep.subr.bf16.mxu0 0
        %452 = vmatpush1.bf16.msra.mxu0 %v430
        %453 = vmatprep.subr.bf16.mxu0 0
        %454 = vmatpush1.bf16.msra.mxu0 %v429
        %455 = vmatprep.subr.bf16.mxu0 0
        %456 = vmatpush1.bf16.msra.mxu0 %v428
        %457 = vmatprep.subr.bf16.mxu0 0
        %458 = vmatpush1.bf16.msra.mxu0 %v427
        %459 = vmatprep.subr.bf16.mxu0 0
        %460 = vmatpush2.bf16.msra.mxu0 0
        %461 = vmatprep.subr.bf16.mxu0 0
        %462 = vmatpush2.bf16.msra.mxu0 0
        %463 = vmatprep.subr.bf16.mxu0 0
        %464 = vmatpush2.bf16.msra.mxu0 0
        %465 = vmatprep.subr.bf16.mxu0 0
        %466 = vmatpush2.bf16.msra.mxu0 0
        %467 = vmatprep.subr.bf16.mxu0 0
        %468 = vmatpush2.bf16.msra.mxu0 0
        %469 = vmatprep.subr.bf16.mxu0 0
        %470 = vmatpush2.bf16.msra.mxu0 0
        %471 = vmatprep.subr.bf16.mxu0 0
        %472 = vmatpush2.bf16.msra.mxu0 0
        %473 = vmatprep.subr.bf16.mxu0 0
        %474 = vmatpush2.bf16.msra.mxu0 0
        %475 = vmatprep.mubr.bf16.mxu0 0
        %476 = vmatmul.mubr.bf16.gmra.mxu0 %v379
        %v477 = vpop.f32.mrf.mxu0
        %v478 = vadd.f32 %v345, %v477
        %v479 = vpop.f32.mrf.mxu0
        %v480 = vpop.f32.mrf.mxu0
        %v481 = vadd.f32 %v345, %v480
        %v482 = vpop.f32.mrf.mxu0
        %483 = vmatprep.mubr.bf16.mxu0 0
        %484 = vmatmul.mubr.bf16.gmra.mxu0 %v380
        %v485 = vpop.f32.mrf.mxu0
        %v486 = vadd.f32 %v345, %v485
        %v487 = vpop.f32.mrf.mxu0
        %v488 = vpop.f32.mrf.mxu0
        %v489 = vadd.f32 %v345, %v488
        %v490 = vpop.f32.mrf.mxu0
        %491 = vmatprep.mubr.bf16.mxu0 0
        %492 = vmatmul.mubr.bf16.gmra.mxu0 %v381
        %v493 = vpop.f32.mrf.mxu0
        %v494 = vadd.f32 %v345, %v493
        %v495 = vpop.f32.mrf.mxu0
        %v496 = vpop.f32.mrf.mxu0
        %v497 = vadd.f32 %v345, %v496
        %v498 = vpop.f32.mrf.mxu0
        %499 = vmatprep.mubr.bf16.mxu0 0
        %500 = vmatmul.mubr.bf16.gmra.mxu0 %v382
        %v501 = vpop.f32.mrf.mxu0
        %v502 = vadd.f32 %v345, %v501
        %v503 = vpop.f32.mrf.mxu0
        %v504 = vpop.f32.mrf.mxu0
        %v505 = vadd.f32 %v345, %v504
        %v506 = vpop.f32.mrf.mxu0
        %507 = vmatprep.mubr.bf16.mxu0 0
        %508 = vmatmul.mubr.bf16.gmra.mxu0 %v383
        %v509 = vpop.f32.mrf.mxu0
        %v510 = vadd.f32 %v345, %v509
        %v511 = vpop.f32.mrf.mxu0
        %v512 = vpop.f32.mrf.mxu0
        %v513 = vadd.f32 %v345, %v512
        %v514 = vpop.f32.mrf.mxu0
        %515 = vmatprep.mubr.bf16.mxu0 0
        %516 = vmatmul.mubr.bf16.gmra.mxu0 %v384
        %v517 = vpop.f32.mrf.mxu0
        %v518 = vadd.f32 %v345, %v517
        %v519 = vpop.f32.mrf.mxu0
        %v520 = vpop.f32.mrf.mxu0
        %v521 = vadd.f32 %v345, %v520
        %v522 = vpop.f32.mrf.mxu0
        %523 = vmatprep.mubr.bf16.mxu0 0
        %524 = vmatmul.mubr.bf16.gmra.mxu0 %v385
        %v525 = vpop.f32.mrf.mxu0
        %v526 = vadd.f32 %v345, %v525
        %v527 = vpop.f32.mrf.mxu0
        %v528 = vpop.f32.mrf.mxu0
        %v529 = vadd.f32 %v345, %v528
        %v530 = vpop.f32.mrf.mxu0
        %531 = vmatprep.mubr.bf16.mxu0 0
        %532 = vmatmul.mubr.bf16.gmra.mxu0 %v386
        %v533 = vpop.f32.mrf.mxu0
        %v534 = vadd.f32 %v345, %v533
        %v535 = vpop.f32.mrf.mxu0
        %v536 = vpop.f32.mrf.mxu0
        %v537 = vadd.f32 %v345, %v536
        %v538 = vpop.f32.mrf.mxu0
        %539 = vdwg.mxu0
        %v540 = vmax.f32 %v478, 0.0
        %v541 = vmax.f32 %v481, 0.0
        %v542 = vmax.f32 %v486, 0.0
        %v543 = vmax.f32 %v489, 0.0
        %v544 = vmax.f32 %v494, 0.0
        %v545 = vmax.f32 %v497, 0.0
        %v546 = vmax.f32 %v502, 0.0
        %v547 = vmax.f32 %v505, 0.0
        %v548 = vmax.f32 %v510, 0.0
        %v549 = vmax.f32 %v513, 0.0
        %v550 = vmax.f32 %v518, 0.0
        %v551 = vmax.f32 %v521, 0.0
        %v552 = vmax.f32 %v526, 0.0
        %v553 = vmax.f32 %v529, 0.0
        %v554 = vmax.f32 %v534, 0.0
        %v555 = vmax.f32 %v537, 0.0
        %v556 = vld [vmem:[%s258] sm:$0xff]
        %557 = vmatprep.subr.mxu0 0.0
        %558 = vmatpush1.msra.mxu0 %v555
        %559 = vmatprep.subr.mxu0 0.0
        %560 = vmatpush1.msra.mxu0 %v554
        %561 = vmatprep.subr.mxu0 0.0
        %562 = vmatpush1.msra.mxu0 %v553
        %563 = vmatprep.subr.mxu0 0.0
        %564 = vmatpush1.msra.mxu0 %v552
        %565 = vmatprep.subr.mxu0 0.0
        %566 = vmatpush1.msra.mxu0 %v551
        %567 = vmatprep.subr.mxu0 0.0
        %568 = vmatpush1.msra.mxu0 %v550
        %569 = vmatprep.subr.mxu0 0.0
        %570 = vmatpush1.msra.mxu0 %v549
        %571 = vmatprep.subr.mxu0 0.0
        %572 = vmatpush1.msra.mxu0 %v548
        %573 = vmatprep.subr.mxu0 0.0
        %574 = vmatpush1.msra.mxu0 %v547
        %575 = vmatprep.subr.mxu0 0.0
        %576 = vmatpush1.msra.mxu0 %v546
        %577 = vmatprep.subr.mxu0 0.0
        %578 = vmatpush1.msra.mxu0 %v545
        %579 = vmatprep.subr.mxu0 0.0
        %580 = vmatpush1.msra.mxu0 %v544
        %581 = vmatprep.subr.mxu0 0.0
        %582 = vmatpush1.msra.mxu0 %v543
        %583 = vmatprep.subr.mxu0 0.0
        %584 = vmatpush1.msra.mxu0 %v542
        %585 = vmatprep.subr.mxu0 0.0
        %586 = vmatpush1.msra.mxu0 %v541
        %587 = vmatprep.subr.mxu0 0.0
        %588 = vmatpush1.msra.mxu0 %v540
        %589 = vmatprep.subr.mxu0 0.0
        %590 = vmatpush2.msra.mxu0 0.0
        %591 = vmatprep.subr.mxu0 0.0
        %592 = vmatpush2.msra.mxu0 0.0
        %593 = vmatprep.subr.mxu0 0.0
        %594 = vmatpush2.msra.mxu0 0.0
        %595 = vmatprep.subr.mxu0 0.0
        %596 = vmatpush2.msra.mxu0 0.0
        %597 = vmatprep.subr.mxu0 0.0
        %598 = vmatpush2.msra.mxu0 0.0
        %599 = vmatprep.subr.mxu0 0.0
        %600 = vmatpush2.msra.mxu0 0.0
        %601 = vmatprep.subr.mxu0 0.0
        %602 = vmatpush2.msra.mxu0 0.0
        %603 = vmatprep.subr.mxu0 0.0
        %604 = vmatpush2.msra.mxu0 0.0
        %605 = vmatprep.subr.mxu0 0.0
        %606 = vmatpush2.msra.mxu0 0.0
        %607 = vmatprep.subr.mxu0 0.0
        %608 = vmatpush2.msra.mxu0 0.0
        %609 = vmatprep.subr.mxu0 0.0
        %610 = vmatpush2.msra.mxu0 0.0
        %611 = vmatprep.subr.mxu0 0.0
        %612 = vmatpush2.msra.mxu0 0.0
        %613 = vmatprep.subr.mxu0 0.0
        %614 = vmatpush2.msra.mxu0 0.0
        %615 = vmatprep.subr.mxu0 0.0
        %616 = vmatpush2.msra.mxu0 0.0
        %617 = vmatprep.subr.mxu0 0.0
        %618 = vmatpush2.msra.mxu0 0.0
        %619 = vmatprep.subr.mxu0 0.0
        %620 = vmatpush2.msra.mxu0 0.0
        %621 = vmatprep.mubr.f32.mxu0 0.0
        %622 = vmatmul.mubr.f32.gmra.mxu0 %v556
        %v623 = vpop.f32.mrf.mxu0
        %v624 = vadd.f32 0.0, %v623
        %v625 = vpop.f32.mrf.mxu0
        %626 = vdwg.mxu0
        %v627 = vld [vmem:[%s4] sm:$0xff]
        %v628 = vld [vmem:[%s4 + $0x8] sm:$0xff]
        %v629 = vld [vmem:[%s4 + $0x10] sm:$0xff]
        %v630 = vld [vmem:[%s4 + $0x18] sm:$0xff]
        %v631 = vld [vmem:[%s5] sm:$0x1]
        %v633 = vlaneseq
        %v634 = vshrl.u32 %v633, 7
        %v635 = vsub.s32 0, %v634
        %v636 = vrot.slane %v631, %v635
        %vm638 = vcmask 261120
        %v640 = vsel %vm638, %v624, 0
        %642 = vmatprep.subr.mxu0 0.0
        %643 = vmatpush1.msra.mxu0 0.0
        %644 = vmatprep.subr.mxu0 0.0
        %645 = vmatpush1.msra.mxu0 0.0
        %646 = vmatprep.subr.mxu0 0.0
        %647 = vmatpush1.msra.mxu0 0.0
        %648 = vmatprep.subr.mxu0 0.0
        %649 = vmatpush1.msra.mxu0 0.0
        %650 = vmatprep.subr.mxu0 0.0
        %651 = vmatpush1.msra.mxu0 0.0
        %652 = vmatprep.subr.mxu0 0.0
        %653 = vmatpush1.msra.mxu0 0.0
        %654 = vmatprep.subr.mxu0 0.0
        %655 = vmatpush1.msra.mxu0 0.0
        %656 = vmatprep.subr.mxu0 0.0
        %657 = vmatpush1.msra.mxu0 0.0
        %658 = vmatprep.subr.mxu0 0.0
        %659 = vmatpush1.msra.mxu0 0.0
        %660 = vmatprep.subr.mxu0 0.0
        %661 = vmatpush1.msra.mxu0 0.0
        %662 = vmatprep.subr.mxu0 0.0
        %663 = vmatpush1.msra.mxu0 0.0
        %664 = vmatprep.subr.mxu0 0.0
        %665 = vmatpush1.msra.mxu0 0.0
        %666 = vmatprep.subr.mxu0 0.0
        %667 = vmatpush1.msra.mxu0 %v630
        %668 = vmatprep.subr.mxu0 0.0
        %669 = vmatpush1.msra.mxu0 %v629
        %670 = vmatprep.subr.mxu0 0.0
        %671 = vmatpush1.msra.mxu0 %v628
        %672 = vmatprep.subr.mxu0 0.0
        %673 = vmatpush1.msra.mxu0 %v627
        %674 = vmatprep.subr.mxu0 0.0
        %675 = vmatpush2.msra.mxu0 0.0
        %676 = vmatprep.subr.mxu0 0.0
        %677 = vmatpush2.msra.mxu0 0.0
        %678 = vmatprep.subr.mxu0 0.0
        %679 = vmatpush2.msra.mxu0 0.0
        %680 = vmatprep.subr.mxu0 0.0
        %681 = vmatpush2.msra.mxu0 0.0
        %682 = vmatprep.subr.mxu0 0.0
        %683 = vmatpush2.msra.mxu0 0.0
        %684 = vmatprep.subr.mxu0 0.0
        %685 = vmatpush2.msra.mxu0 0.0
        %686 = vmatprep.subr.mxu0 0.0
        %687 = vmatpush2.msra.mxu0 0.0
        %688 = vmatprep.subr.mxu0 0.0
        %689 = vmatpush2.msra.mxu0 0.0
        %690 = vmatprep.subr.mxu0 0.0
        %691 = vmatpush2.msra.mxu0 0.0
        %692 = vmatprep.subr.mxu0 0.0
        %693 = vmatpush2.msra.mxu0 0.0
        %694 = vmatprep.subr.mxu0 0.0
        %695 = vmatpush2.msra.mxu0 0.0
        %696 = vmatprep.subr.mxu0 0.0
        %697 = vmatpush2.msra.mxu0 0.0
        %698 = vmatprep.subr.mxu0 0.0
        %699 = vmatpush2.msra.mxu0 0.0
        %700 = vmatprep.subr.mxu0 0.0
        %701 = vmatpush2.msra.mxu0 0.0
        %702 = vmatprep.subr.mxu0 0.0
        %703 = vmatpush2.msra.mxu0 0.0
        %704 = vmatprep.subr.mxu0 0.0
        %705 = vmatpush2.msra.mxu0 0.0
        %706 = vmatprep.mubr.f32.mxu0 0.0
        %707 = vmatmul.mubr.f32.gmra.mxu0 %v640
        %v708 = vpop.f32.mrf.mxu0
        %v709 = vadd.f32 %v636, %v708
        %v710 = vpop.f32.mrf.mxu0
        %711 = vdwg.mxu0
        %712 = vst.msk [vmem:[%s296] sm:$0xff] %vm638, %v709
        %s713 = sand.u32 %s172, 1
        %s714 = scalar_lea.sflag [#allocation4], %s713
        %s715 = sand.u32 %s172, 1
        %s716 = smul.addr %s715, 8
        %s717 = scalar_lea.vmem [#allocation5], %s716
        // Predicated region
        $region49: #{tpu_custom_call.1} parent=43 // pred_check
          %p718 = pneg %p182
        $region50: #{tpu_custom_call.1} parent=43 // pred_check_branch
          %720 = sbr.rel (%p718) target = $region52
        $region51: #{tpu_custom_call.1} parent=43 // pred_region
          %s722 = ssub.s32 128, 128
          %723 = vsyncadd %s714, %s722
          %s724 = smul.addr %s23, 128
          %s725 = scalar_lea.hbm %s6, %s724
          %s727 = sshll.u32 %s717, 4
          %s728 = int_to_ptr.vmem [resolvable:$true] %s727
          %730 = dma.vmem_to_hbm [thread:$0]  %s728, 128, %s725, %s714
        $region52: #{tpu_custom_call.1} parent=43 // pred_fallthru
          _
      $region44: #{tpu_custom_call.1} parent=5 // pred_fallthru
        _
      %p731 = scmp.le.s32.totalorder 2, %s18
      // Predicated region
      $region53: #{tpu_custom_call.1} parent=5 // pred_check
        %p732 = pneg %p731
      $region54: #{tpu_custom_call.1} parent=5 // pred_check_branch
        %734 = sbr.rel (%p732) target = $region56
      $region55: #{tpu_custom_call.1} parent=5 // pred_region
        %s735 = ssub.s32 %s18, 2
        // Predicated region
        $region57: #{tpu_custom_call.1} parent=55 // pred_check
          %p736 = pneg %p188
        $region58: #{tpu_custom_call.1} parent=55 // pred_check_branch
          %738 = sbr.rel (%p736) target = $region60
        $region59: #{tpu_custom_call.1} parent=55 // pred_region
          %s739 = sand.u32 %s173, 1
          %s740 = scalar_lea.sflag [#allocation4], %s739
          %s741 = sand.u32 %s173, 1
          %s742 = smul.addr %s741, 8
          %s743 = scalar_lea.vmem [#allocation5], %s742
          %744 = dma.done %s740, 128
        $region60: #{tpu_custom_call.1} parent=55 // pred_fallthru
          _
      $region56: #{tpu_custom_call.1} parent=5 // pred_fallthru
        _
    $region6: #{tpu_custom_call.1} parent=1 // loop_footer
      %s22 = sadd.s32 1, %s18
    $region7: #{tpu_custom_call.1} parent=1 // loop_footer_branch
      %17 = sbr.rel target = $region3
    $region8: #{tpu_custom_call.1} parent=1 // loop_exit
      _
    %745 = vsyncpa [#allocation3], 1
    %s746 = scalar_lea.sflag [#allocation3], 1
    %747 = vsyncpa %s746, 1
    %748 = vsyncpa [#allocation4], 1
    %s749 = scalar_lea.sflag [#allocation4], 1
    %750 = vsyncpa %s749, 1

</llo_original>
